<compile_context>
chip_gen: v7x
topology: tpu7x:2x2x1
jax: 0.10.0
libtpu: 0.0.40
codegen_flags: <defaults>
</compile_context>

<pallas_src>
import functools
import math

import jax
import jax.numpy as jnp
from jax import lax
from jax.experimental import pallas as pl
from jax.experimental.pallas import tpu as pltpu


def _round_up(x, m):
    return ((x + m - 1) // m) * m


def _combined_loss_kernel(img1_ref, img2_ref, unclip1_ref, unclip2_ref,
                          ab_ref, aa_ref, bb_ref, mse_ref, loss_ref, cnt_ref,
                          *, alpha, betta, n_rows, tile_n, steps_per_core):
    ci = pl.program_id(0)      # core-split axis ("parallel")
    i = pl.program_id(1)       # streaming reduction axis ("arbitrary")

    @pl.when(i == 0)
    def _init():
        ab_ref[...] = jnp.zeros_like(ab_ref)
        aa_ref[...] = jnp.zeros_like(aa_ref)
        bb_ref[...] = jnp.zeros_like(bb_ref)
        mse_ref[...] = jnp.zeros_like(mse_ref)
        loss_ref[...] = jnp.zeros_like(loss_ref)
        cnt_ref[...] = jnp.zeros_like(cnt_ref)

    # Row-validity mask.  Uses the UNCLAMPED block index, so both the ragged
    # last block and the core-padding blocks (whose index_map was clamped to a
    # valid block) get their rows zeroed here.
    row0 = (ci * steps_per_core + i) * tile_n
    row_ids = row0 + lax.broadcasted_iota(jnp.int32, (tile_n, 1), 0)
    row_ok = row_ids < n_rows

    x_i1 = img1_ref[...].astype(jnp.float32)
    x_i2 = img2_ref[...].astype(jnp.float32)
    x_u1 = unclip1_ref[...].astype(jnp.float32)
    x_u2 = unclip2_ref[...].astype(jnp.float32)

    # Zeroing invalid rows makes them contribute 0 to every column sum and
    # fail the ||v1|| > 1e-8 mask below (same as zero padding, no extra pass).
    diff_img = jnp.where(row_ok, x_i1 - x_i2, 0.0)
    diff_unclip = jnp.where(row_ok, x_u1 - x_u2, 0.0)

    sq_img = jnp.sum(diff_img * diff_img, axis=-1, keepdims=True)        # (tn,1)
    sq_unclip = jnp.sum(diff_unclip * diff_unclip, axis=-1, keepdims=True)

    # F.normalize(dim=-1), eps=1e-12:  x * rsqrt(max(||x||^2, 1e-24))
    inv_img_c = lax.rsqrt(jnp.maximum(sq_img, 1e-24))
    inv_unclip_c = lax.rsqrt(jnp.maximum(sq_unclip, 1e-24))
    A = diff_img * inv_img_c                                             # (tn,D)
    B = diff_unclip * inv_unclip_c

    tn8 = tile_n // 8

    def acc8(x):
        # (tile_n, d) -> (8, d) partial sums: plain VPU adds over full vregs.
        # The final 8 -> 1 sublane reduce happens once, in the wrapper.
        return jnp.sum(x.reshape(tn8, 8, x.shape[-1]), axis=0)

    # ---- cosine-embedding accumulators (per feature dim) --------------------
    ab_ref[...] += acc8(A * B)
    aa_ref[...] += acc8(A * A)
    bb_ref[...] += acc8(B * B)

    # ---- MSE accumulator -----------------------------------------------------
    d_im = diff_img - diff_unclip
    mse_ref[...] += acc8(d_im * d_im)

    # ---- TransformationBasedRotationLoss (closed-form bmm with ones) --------
    mask = sq_img > 1e-16                 # ||v1|| > 1e-8 row filter, (tn,1)
    # n1 equals unit_vector(v1) exactly on every kept row (the 1e-24 clamp only
    # bites when ||v1|| <= 1e-12 < 1e-8, and those rows are masked out).
    n1 = A
    # unit_vector(v2) norm with NO clamp (PyTorch NaN/inf propagation kept).
    inv_unclip = lax.rsqrt(sq_unclip)

    p = jnp.sum(n1 * diff_unclip, axis=-1, keepdims=True)               # <n1,v2>
    cos_a = jnp.clip(p * inv_unclip, -1.0, 1.0)
    sin_a = jnp.sqrt(jnp.clip(1.0 - cos_a * cos_a, 0.0, 1.0))   # sin(arccos(c))
    cm1 = cos_a - 1.0                                           # cos(arccos(c)) - 1

    # proj = v2 - n1 <n1, v2>;   ||proj||^2 = ||v2||^2 - p^2  (n1 unit on kept rows)
    proj = diff_unclip - n1 * p
    n2 = proj * lax.rsqrt(sq_unclip - p * p)

    s1 = jnp.sum(n1, axis=-1, keepdims=True)                    # (tn,1)
    s2 = jnp.sum(n2, axis=-1, keepdims=True)

    # bmm(transform_a, ones) == (n2*rowsum(n1) - n1*rowsum(n2)) * sin_a, etc.
    # Per-row scalars are folded before the lane broadcast; sqrt(alpha)/sqrt(betta)
    # are baked into sin_a / cm1 when legal so loss_row = ua^2 + ub^2.
    if alpha >= 0.0 and betta >= 0.0:
        sin_a = sin_a * math.sqrt(alpha)
        cm1 = cm1 * math.sqrt(betta)
        u_a = n2 * (s1 * sin_a) - n1 * (s2 * sin_a)
        u_b = n1 * (s1 * cm1) + n2 * (s2 * cm1)
        loss_row = u_a * u_a + u_b * u_b
    else:
        u_a = n2 * (s1 * sin_a) - n1 * (s2 * sin_a)
        u_b = n1 * (s1 * cm1) + n2 * (s2 * cm1)
        loss_row = alpha * (u_a * u_a) + betta * (u_b * u_b)

    # Keep-where (NOT multiply) so NaNs of filtered / padded rows are discarded
    # while NaNs of kept degenerate rows still propagate like the reference.
    loss_row = jnp.where(mask, loss_row, 0.0)
    loss_ref[...] += acc8(loss_row)
    cnt_ref[...] += acc8(jnp.where(mask, jnp.float32(1.0), jnp.float32(0.0)))


def combined_loss_cos_trans(init_img_vec, next_img_vec, init_unclip, pred_unclip,
                            *, weight_rote=0.5, weight_mse=0.5, cos_way=-1,
                            alpha=0.7, betta=0.3, num_core_splits=2):
    """Inputs (N, 1, D). Returns (weight_rote*rotation_loss, weight_mse*mse), each (D,)."""
    a = jnp.squeeze(init_img_vec, axis=1)
    b = jnp.squeeze(next_img_vec, axis=1)
    c = jnp.squeeze(init_unclip, axis=1)
    d = jnp.squeeze(pred_unclip, axis=1)
    N, D = a.shape

    # Row tile: ~1 MiB of f32 per streamed input tile (>=512 rows for D<=512),
    # so 4 inputs x 2 pipeline buffers stay around ~8 MiB and all in-kernel
    # f32 intermediates fit well under the 32 MiB scoped-VMEM request on
    # v5e / v6e / v7x alike.  Capped at 2048 rows to bound the unrolled adds.
    target_elems = 1 << 18
    tile_n = int(max(8, min(_round_up(N, 8),
                            (target_elems // max(D, 1)) // 8 * 8, 2048)))

    nblocks = pl.cdiv(N, tile_n)
    C = int(num_core_splits)               # 2: uses both TCs on v7x, harmless elsewhere
    steps = pl.cdiv(nblocks, C)            # grid steps per core split
    last_block = nblocks - 1

    def in_map(ci, i):
        # Clamp so the (C*steps - nblocks) padded grid points re-read a valid
        # block; the in-kernel row mask (unclamped index) zeroes their rows.
        return (jnp.minimum(ci * steps + i, last_block), 0)

    def out_map(ci, i):
        return (ci, 0)                      # resident accumulator along i

    kernel = functools.partial(
        _combined_loss_kernel,
        alpha=float(alpha), betta=float(betta), n_rows=N,
        tile_n=tile_n, steps_per_core=steps)

    f32 = jnp.float32
    ab, aa, bb, mse_s, loss_s, cnt = pl.pallas_call(
        kernel,
        out_shape=(jax.ShapeDtypeStruct((C * 8, D), f32),
                   jax.ShapeDtypeStruct((C * 8, D), f32),
                   jax.ShapeDtypeStruct((C * 8, D), f32),
                   jax.ShapeDtypeStruct((C * 8, D), f32),
                   jax.ShapeDtypeStruct((C * 8, D), f32),
                   jax.ShapeDtypeStruct((C * 8, 1), f32)),
        grid=(C, steps),
        in_specs=[pl.BlockSpec((tile_n, D), in_map)] * 4,
        out_specs=(pl.BlockSpec((8, D), out_map),
                   pl.BlockSpec((8, D), out_map),
                   pl.BlockSpec((8, D), out_map),
                   pl.BlockSpec((8, D), out_map),
                   pl.BlockSpec((8, D), out_map),
                   pl.BlockSpec((8, 1), out_map)),
        compiler_params=pltpu.CompilerParams(
            dimension_semantics=("parallel", "arbitrary"),
            vmem_limit_bytes=32 * 1024 * 1024),
    )(a, b, c, d)

    # Tiny cross-core / cross-sublane finalize in plain JAX (a few (D,) vectors).
    sum_ab = jnp.sum(ab, axis=0)
    sum_aa = jnp.sum(aa, axis=0)
    sum_bb = jnp.sum(bb, axis=0)
    mse = jnp.sum(mse_s, axis=0) * (1.0 / N)            # mean over dim 0
    loss_sum = jnp.sum(loss_s, axis=0)
    count = jnp.sum(cnt)

    cos_sim = sum_ab / jnp.maximum(jnp.sqrt(sum_aa * sum_bb), 1e-8)
    if cos_way == 1:
        # 1 - CosineEmbeddingLoss(target=+1) == 1 - (1 - cos) == cos
        cos_loss = cos_sim
    else:
        # CosineEmbeddingLoss(target=-1), margin=0 => max(0, cos)
        cos_loss = jnp.maximum(cos_sim, 0.0)

    trans = loss_sum / count                            # mean over kept rows
    trans = jnp.nan_to_num(trans, nan=0.0, posinf=0.1, neginf=-0.1)

    rotation_loss = cos_loss + trans if (alpha or betta) else cos_loss
    return weight_rote * rotation_loss, weight_mse * mse


def _reference(init_img_vec, next_img_vec, init_unclip, pred_unclip,
               *, weight_rote=0.5, weight_mse=0.5, cos_way=-1,
               alpha=0.7, betta=0.3):
    """Pure-JAX (eager) reference mirroring the PyTorch module."""
    diff_img = (jnp.squeeze(init_img_vec, 1) - jnp.squeeze(next_img_vec, 1)).astype(jnp.float32)
    diff_unclip = (jnp.squeeze(init_unclip, 1) - jnp.squeeze(pred_unclip, 1)).astype(jnp.float32)
    img_n = jnp.linalg.norm(diff_img, axis=-1, keepdims=True)
    unc_n = jnp.linalg.norm(diff_unclip, axis=-1, keepdims=True)
    A = diff_img / jnp.maximum(img_n, 1e-12)
    B = diff_unclip / jnp.maximum(unc_n, 1e-12)
    cos = jnp.sum(A * B, axis=0) / jnp.maximum(
        jnp.linalg.norm(A, axis=0) * jnp.linalg.norm(B, axis=0), 1e-8)
    cos_loss = cos if cos_way == 1 else jnp.maximum(cos, 0.0)
    mse = jnp.mean((diff_img - diff_unclip) ** 2, axis=0)

    keep = img_n[:, 0] > 1e-8                     # eager boolean indexing
    v1, v2 = diff_img[keep], diff_unclip[keep]
    n1 = v1 / jnp.linalg.norm(v1, axis=-1, keepdims=True)
    u2 = v2 / jnp.linalg.norm(v2, axis=-1, keepdims=True)
    ang = jnp.arccos(jnp.clip(jnp.sum(n1 * u2, axis=-1), -1.0, 1.0))
    proj = v2 - n1 * jnp.sum(n1 * v2, axis=-1, keepdims=True)
    n2 = proj / jnp.linalg.norm(proj, axis=-1, keepdims=True)
    sin_a = jnp.sin(ang)[:, None, None]
    cm1 = (jnp.cos(ang) - 1.0)[:, None, None]
    ta = (n2[:, :, None] * n1[:, None, :] - n1[:, :, None] * n2[:, None, :]) * sin_a
    tb = (n1[:, :, None] * n1[:, None, :] + n2[:, :, None] * n2[:, None, :]) * cm1
    ua, ub = jnp.sum(ta, axis=2), jnp.sum(tb, axis=2)
    trans = jnp.nan_to_num(jnp.mean(alpha * ua ** 2 + betta * ub ** 2, axis=0),
                           nan=0.0, posinf=0.1, neginf=-0.1)
    rot = cos_loss + trans if (alpha or betta) else cos_loss
    return weight_rote * rot, weight_mse * mse


if __name__ == "__main__":
    key = jax.random.PRNGKey(0)
    k1, k2, k3, k4 = jax.random.split(key, 4)
    N, D = 8, 32
    init_img_vec = jax.random.normal(k1, (N, 1, D), dtype=jnp.float32)
    next_img_vec = jax.random.normal(k2, (N, 1, D), dtype=jnp.float32)
    init_unclip = jax.random.normal(k3, (N, 1, D), dtype=jnp.float32)
    pred_unclip = jax.random.normal(k4, (N, 1, D), dtype=jnp.float32)

    rote_loss, mse_loss = combined_loss_cos_trans(
        init_img_vec, next_img_vec, init_unclip, pred_unclip)
    jax.block_until_ready((rote_loss, mse_loss))
    assert rote_loss.shape == (D,) and mse_loss.shape == (D,)

    ref_rote, ref_mse = _reference(init_img_vec, next_img_vec,
                                   init_unclip, pred_unclip)
    assert jnp.allclose(rote_loss, ref_rote, rtol=1e-4, atol=1e-4)
    assert jnp.allclose(mse_loss, ref_mse, rtol=1e-4, atol=1e-4)
    print("KERNEL_OK")
</pallas_src>

<mosaic_0001>
module attributes {stable_mosaic.version = 11 : i64} {
  func.func @_combined_loss_kernel(%arg0: i32, %arg1: i32, %arg2: memref<8x32xf32, #tpu.memory_space<vmem>>, %arg3: memref<8x32xf32, #tpu.memory_space<vmem>>, %arg4: memref<8x32xf32, #tpu.memory_space<vmem>>, %arg5: memref<8x32xf32, #tpu.memory_space<vmem>>, %arg6: memref<8x32xf32, #tpu.memory_space<vmem>>, %arg7: memref<8x32xf32, #tpu.memory_space<vmem>>, %arg8: memref<8x32xf32, #tpu.memory_space<vmem>>, %arg9: memref<8x32xf32, #tpu.memory_space<vmem>>, %arg10: memref<8x32xf32, #tpu.memory_space<vmem>>, %arg11: memref<8x1xf32, #tpu.memory_space<vmem>>) attributes {dimension_semantics = [#tpu.dimension_semantics<parallel>, #tpu.dimension_semantics<arbitrary>], iteration_bounds = array<i64: 2, 1>, scalar_prefetch = 0 : i64, scratch_operands = 0 : i64, tpu.core_type = #tpu.core_type<tc>, window_params = [{transform_indices = @transform_0, window_bounds = array<i64: 8, 32>}, {transform_indices = @transform_1, window_bounds = array<i64: 8, 32>}, {transform_indices = @transform_2, window_bounds = array<i64: 8, 32>}, {transform_indices = @transform_3, window_bounds = array<i64: 8, 32>}, {transform_indices = @transform_4, window_bounds = array<i64: 8, 32>}, {transform_indices = @transform_5, window_bounds = array<i64: 8, 32>}, {transform_indices = @transform_6, window_bounds = array<i64: 8, 32>}, {transform_indices = @transform_7, window_bounds = array<i64: 8, 32>}, {transform_indices = @transform_8, window_bounds = array<i64: 8, 32>}, {transform_indices = @transform_9, window_bounds = array<i64: 8, 1>}]} {
    %c0_i32 = arith.constant 0 : i32
    %0 = arith.cmpi eq, %arg1, %c0_i32 : i32
    %1 = arith.extui %0 : i1 to i32
    %c0_i32_0 = arith.constant 0 : i32
    %2 = arith.cmpi ne, %1, %c0_i32_0 : i32
    scf.if %2 {
      %cst_59 = arith.constant 0.000000e+00 : f32
      %137 = vector.broadcast %cst_59 : f32 to vector<8x32xf32>
      %c0_60 = arith.constant 0 : index
      %c0_61 = arith.constant 0 : index
      %138 = vector.load %arg6[%c0_60, %c0_61] : memref<8x32xf32, #tpu.memory_space<vmem>>, vector<8x32xf32>
      tpu.vector_store %arg6[%c0_60, %c0_61], %137 {strides = array<i32>} : memref<8x32xf32, #tpu.memory_space<vmem>>, vector<8x32xf32>,
      %cst_62 = arith.constant 0.000000e+00 : f32
      %139 = vector.broadcast %cst_62 : f32 to vector<8x32xf32>
      %c0_63 = arith.constant 0 : index
      %c0_64 = arith.constant 0 : index
      %140 = vector.load %arg7[%c0_63, %c0_64] : memref<8x32xf32, #tpu.memory_space<vmem>>, vector<8x32xf32>
      tpu.vector_store %arg7[%c0_63, %c0_64], %139 {strides = array<i32>} : memref<8x32xf32, #tpu.memory_space<vmem>>, vector<8x32xf32>,
      %cst_65 = arith.constant 0.000000e+00 : f32
      %141 = vector.broadcast %cst_65 : f32 to vector<8x32xf32>
      %c0_66 = arith.constant 0 : index
      %c0_67 = arith.constant 0 : index
      %142 = vector.load %arg8[%c0_66, %c0_67] : memref<8x32xf32, #tpu.memory_space<vmem>>, vector<8x32xf32>
      tpu.vector_store %arg8[%c0_66, %c0_67], %141 {strides = array<i32>} : memref<8x32xf32, #tpu.memory_space<vmem>>, vector<8x32xf32>,
      %cst_68 = arith.constant 0.000000e+00 : f32
      %143 = vector.broadcast %cst_68 : f32 to vector<8x32xf32>
      %c0_69 = arith.constant 0 : index
      %c0_70 = arith.constant 0 : index
      %144 = vector.load %arg9[%c0_69, %c0_70] : memref<8x32xf32, #tpu.memory_space<vmem>>, vector<8x32xf32>
      tpu.vector_store %arg9[%c0_69, %c0_70], %143 {strides = array<i32>} : memref<8x32xf32, #tpu.memory_space<vmem>>, vector<8x32xf32>,
      %cst_71 = arith.constant 0.000000e+00 : f32
      %145 = vector.broadcast %cst_71 : f32 to vector<8x32xf32>
      %c0_72 = arith.constant 0 : index
      %c0_73 = arith.constant 0 : index
      %146 = vector.load %arg10[%c0_72, %c0_73] : memref<8x32xf32, #tpu.memory_space<vmem>>, vector<8x32xf32>
      tpu.vector_store %arg10[%c0_72, %c0_73], %145 {strides = array<i32>} : memref<8x32xf32, #tpu.memory_space<vmem>>, vector<8x32xf32>,
      %cst_74 = arith.constant 0.000000e+00 : f32
      %147 = vector.broadcast %cst_74 : f32 to vector<8x1xf32>
      %c0_75 = arith.constant 0 : index
      %c0_76 = arith.constant 0 : index
      %148 = vector.load %arg11[%c0_75, %c0_76] : memref<8x1xf32, #tpu.memory_space<vmem>>, vector<8x1xf32>
      tpu.vector_store %arg11[%c0_75, %c0_76], %147 {strides = array<i32>} : memref<8x1xf32, #tpu.memory_space<vmem>>, vector<8x1xf32>,
    } else {
    }
    %c1_i32 = arith.constant 1 : i32
    %3 = arith.muli %arg0, %c1_i32 : i32
    %4 = arith.addi %3, %arg1 : i32
    %c8_i32 = arith.constant 8 : i32
    %5 = arith.muli %4, %c8_i32 : i32
    %6 = tpu.iota {dimensions = array<i32: 0>} : vector<8x1xi32>
    %7 = vector.broadcast %5 : i32 to vector<8x1xi32>
    %8 = arith.addi %7, %6 : vector<8x1xi32>
    %c8_i32_1 = arith.constant 8 : i32
    %9 = vector.broadcast %c8_i32_1 : i32 to vector<8x1xi32>
    %10 = arith.cmpi slt, %8, %9 : vector<8x1xi32>
    %c0 = arith.constant 0 : index
    %c0_2 = arith.constant 0 : index
    %11 = vector.load %arg2[%c0, %c0_2] : memref<8x32xf32, #tpu.memory_space<vmem>>, vector<8x32xf32>
    %c0_3 = arith.constant 0 : index
    %c0_4 = arith.constant 0 : index
    %12 = vector.load %arg3[%c0_3, %c0_4] : memref<8x32xf32, #tpu.memory_space<vmem>>, vector<8x32xf32>
    %c0_5 = arith.constant 0 : index
    %c0_6 = arith.constant 0 : index
    %13 = vector.load %arg4[%c0_5, %c0_6] : memref<8x32xf32, #tpu.memory_space<vmem>>, vector<8x32xf32>
    %c0_7 = arith.constant 0 : index
    %c0_8 = arith.constant 0 : index
    %14 = vector.load %arg5[%c0_7, %c0_8] : memref<8x32xf32, #tpu.memory_space<vmem>>, vector<8x32xf32>
    %15 = arith.subf %11, %12 : vector<8x32xf32>
    %cst = arith.constant 0.000000e+00 : f32
    %16 = vector.shape_cast %10 : vector<8x1xi1> to vector<8x1xi1>
    %17 = vector.broadcast %16 : vector<8x1xi1> to vector<8x32xi1>
    %18 = vector.broadcast %cst : f32 to vector<8x32xf32>
    %19 = arith.select %17, %15, %18 : vector<8x32xi1>, vector<8x32xf32>
    %20 = arith.subf %13, %14 : vector<8x32xf32>
    %cst_9 = arith.constant 0.000000e+00 : f32
    %21 = vector.shape_cast %10 : vector<8x1xi1> to vector<8x1xi1>
    %22 = vector.broadcast %21 : vector<8x1xi1> to vector<8x32xi1>
    %23 = vector.broadcast %cst_9 : f32 to vector<8x32xf32>
    %24 = arith.select %22, %20, %23 : vector<8x32xi1>, vector<8x32xf32>
    %25 = arith.mulf %19, %19 : vector<8x32xf32>
    %cst_10 = arith.constant dense<0.000000e+00> : vector<8xf32>
    %26 = vector.multi_reduction <add>, %25, %cst_10 [1] : vector<8x32xf32> to vector<8xf32>
    %27 = vector.shape_cast %26 : vector<8xf32> to vector<8x1xf32>
    %28 = arith.mulf %24, %24 : vector<8x32xf32>
    %cst_11 = arith.constant dense<0.000000e+00> : vector<8xf32>
    %29 = vector.multi_reduction <add>, %28, %cst_11 [1] : vector<8x32xf32> to vector<8xf32>
    %30 = vector.shape_cast %29 : vector<8xf32> to vector<8x1xf32>
    %cst_12 = arith.constant 1.000000e-24 : f32
    %31 = vector.broadcast %cst_12 : f32 to vector<8x1xf32>
    %32 = arith.maximumf %27, %31 : vector<8x1xf32>
    %33 = math.rsqrt %32 : vector<8x1xf32>
    %cst_13 = arith.constant 1.000000e-24 : f32
    %34 = vector.broadcast %cst_13 : f32 to vector<8x1xf32>
    %35 = arith.maximumf %30, %34 : vector<8x1xf32>
    %36 = math.rsqrt %35 : vector<8x1xf32>
    %37 = vector.broadcast %33 : vector<8x1xf32> to vector<8x32xf32>
    %38 = arith.mulf %19, %37 : vector<8x32xf32>
    %39 = vector.broadcast %36 : vector<8x1xf32> to vector<8x32xf32>
    %40 = arith.mulf %24, %39 : vector<8x32xf32>
    %c0_14 = arith.constant 0 : index
    %c0_15 = arith.constant 0 : index
    %41 = vector.load %arg6[%c0_14, %c0_15] : memref<8x32xf32, #tpu.memory_space<vmem>>, vector<8x32xf32>
    %42 = arith.mulf %38, %40 : vector<8x32xf32>
    %43 = vector.shape_cast %42 : vector<8x32xf32> to vector<1x8x32xf32>
    %cst_16 = arith.constant dense<0.000000e+00> : vector<8x32xf32>
    %44 = vector.multi_reduction <add>, %43, %cst_16 [0] : vector<1x8x32xf32> to vector<8x32xf32>
    %45 = arith.addf %41, %44 : vector<8x32xf32>
    %c0_17 = arith.constant 0 : index
    %c0_18 = arith.constant 0 : index
    %46 = vector.load %arg6[%c0_17, %c0_18] : memref<8x32xf32, #tpu.memory_space<vmem>>, vector<8x32xf32>
    tpu.vector_store %arg6[%c0_17, %c0_18], %45 {strides = array<i32>} : memref<8x32xf32, #tpu.memory_space<vmem>>, vector<8x32xf32>,
    %c0_19 = arith.constant 0 : index
    %c0_20 = arith.constant 0 : index
    %47 = vector.load %arg7[%c0_19, %c0_20] : memref<8x32xf32, #tpu.memory_space<vmem>>, vector<8x32xf32>
    %48 = arith.mulf %38, %38 : vector<8x32xf32>
    %49 = vector.shape_cast %48 : vector<8x32xf32> to vector<1x8x32xf32>
    %cst_21 = arith.constant dense<0.000000e+00> : vector<8x32xf32>
    %50 = vector.multi_reduction <add>, %49, %cst_21 [0] : vector<1x8x32xf32> to vector<8x32xf32>
    %51 = arith.addf %47, %50 : vector<8x32xf32>
    %c0_22 = arith.constant 0 : index
    %c0_23 = arith.constant 0 : index
    %52 = vector.load %arg7[%c0_22, %c0_23] : memref<8x32xf32, #tpu.memory_space<vmem>>, vector<8x32xf32>
    tpu.vector_store %arg7[%c0_22, %c0_23], %51 {strides = array<i32>} : memref<8x32xf32, #tpu.memory_space<vmem>>, vector<8x32xf32>,
    %c0_24 = arith.constant 0 : index
    %c0_25 = arith.constant 0 : index
    %53 = vector.load %arg8[%c0_24, %c0_25] : memref<8x32xf32, #tpu.memory_space<vmem>>, vector<8x32xf32>
    %54 = arith.mulf %40, %40 : vector<8x32xf32>
    %55 = vector.shape_cast %54 : vector<8x32xf32> to vector<1x8x32xf32>
    %cst_26 = arith.constant dense<0.000000e+00> : vector<8x32xf32>
    %56 = vector.multi_reduction <add>, %55, %cst_26 [0] : vector<1x8x32xf32> to vector<8x32xf32>
    %57 = arith.addf %53, %56 : vector<8x32xf32>
    %c0_27 = arith.constant 0 : index
    %c0_28 = arith.constant 0 : index
    %58 = vector.load %arg8[%c0_27, %c0_28] : memref<8x32xf32, #tpu.memory_space<vmem>>, vector<8x32xf32>
    tpu.vector_store %arg8[%c0_27, %c0_28], %57 {strides = array<i32>} : memref<8x32xf32, #tpu.memory_space<vmem>>, vector<8x32xf32>,
    %59 = arith.subf %19, %24 : vector<8x32xf32>
    %c0_29 = arith.constant 0 : index
    %c0_30 = arith.constant 0 : index
    %60 = vector.load %arg9[%c0_29, %c0_30] : memref<8x32xf32, #tpu.memory_space<vmem>>, vector<8x32xf32>
    %61 = arith.mulf %59, %59 : vector<8x32xf32>
    %62 = vector.shape_cast %61 : vector<8x32xf32> to vector<1x8x32xf32>
    %cst_31 = arith.constant dense<0.000000e+00> : vector<8x32xf32>
    %63 = vector.multi_reduction <add>, %62, %cst_31 [0] : vector<1x8x32xf32> to vector<8x32xf32>
    %64 = arith.addf %60, %63 : vector<8x32xf32>
    %c0_32 = arith.constant 0 : index
    %c0_33 = arith.constant 0 : index
    %65 = vector.load %arg9[%c0_32, %c0_33] : memref<8x32xf32, #tpu.memory_space<vmem>>, vector<8x32xf32>
    tpu.vector_store %arg9[%c0_32, %c0_33], %64 {strides = array<i32>} : memref<8x32xf32, #tpu.memory_space<vmem>>, vector<8x32xf32>,
    %cst_34 = arith.constant 1.000000e-16 : f32
    %66 = vector.broadcast %cst_34 : f32 to vector<8x1xf32>
    %67 = arith.cmpf ogt, %27, %66 : vector<8x1xf32>
    %68 = math.rsqrt %30 : vector<8x1xf32>
    %69 = arith.mulf %38, %24 : vector<8x32xf32>
    %cst_35 = arith.constant dense<0.000000e+00> : vector<8xf32>
    %70 = vector.multi_reduction <add>, %69, %cst_35 [1] : vector<8x32xf32> to vector<8xf32>
    %71 = vector.shape_cast %70 : vector<8xf32> to vector<8x1xf32>
    %72 = arith.mulf %71, %68 : vector<8x1xf32>
    %cst_36 = arith.constant -1.000000e+00 : f32
    %cst_37 = arith.constant 1.000000e+00 : f32
    %73 = vector.broadcast %cst_36 : f32 to vector<8x1xf32>
    %74 = arith.maximumf %73, %72 : vector<8x1xf32>
    %75 = vector.broadcast %cst_37 : f32 to vector<8x1xf32>
    %76 = arith.minimumf %75, %74 : vector<8x1xf32>
    %77 = arith.mulf %76, %76 : vector<8x1xf32>
    %cst_38 = arith.constant 1.000000e+00 : f32
    %78 = vector.broadcast %cst_38 : f32 to vector<8x1xf32>
    %79 = arith.subf %78, %77 : vector<8x1xf32>
    %cst_39 = arith.constant 0.000000e+00 : f32
    %cst_40 = arith.constant 1.000000e+00 : f32
    %80 = vector.broadcast %cst_39 : f32 to vector<8x1xf32>
    %81 = arith.maximumf %80, %79 : vector<8x1xf32>
    %82 = vector.broadcast %cst_40 : f32 to vector<8x1xf32>
    %83 = arith.minimumf %82, %81 : vector<8x1xf32>
    %84 = math.sqrt %83 : vector<8x1xf32>
    %cst_41 = arith.constant 1.000000e+00 : f32
    %85 = vector.broadcast %cst_41 : f32 to vector<8x1xf32>
    %86 = arith.subf %76, %85 : vector<8x1xf32>
    %87 = vector.broadcast %71 : vector<8x1xf32> to vector<8x32xf32>
    %88 = arith.mulf %38, %87 : vector<8x32xf32>
    %89 = arith.subf %24, %88 : vector<8x32xf32>
    %90 = arith.mulf %71, %71 : vector<8x1xf32>
    %91 = arith.subf %30, %90 : vector<8x1xf32>
    %92 = math.rsqrt %91 : vector<8x1xf32>
    %93 = vector.broadcast %92 : vector<8x1xf32> to vector<8x32xf32>
    %94 = arith.mulf %89, %93 : vector<8x32xf32>
    %cst_42 = arith.constant dense<0.000000e+00> : vector<8xf32>
    %95 = vector.multi_reduction <add>, %38, %cst_42 [1] : vector<8x32xf32> to vector<8xf32>
    %96 = vector.shape_cast %95 : vector<8xf32> to vector<8x1xf32>
    %cst_43 = arith.constant dense<0.000000e+00> : vector<8xf32>
    %97 = vector.multi_reduction <add>, %94, %cst_43 [1] : vector<8x32xf32> to vector<8xf32>
    %98 = vector.shape_cast %97 : vector<8xf32> to vector<8x1xf32>
    %cst_44 = arith.constant 8.366600e-01 : f32
    %99 = vector.broadcast %cst_44 : f32 to vector<8x1xf32>
    %100 = arith.mulf %84, %99 : vector<8x1xf32>
    %cst_45 = arith.constant 0.547722578 : f32
    %101 = vector.broadcast %cst_45 : f32 to vector<8x1xf32>
    %102 = arith.mulf %86, %101 : vector<8x1xf32>
    %103 = arith.mulf %96, %100 : vector<8x1xf32>
    %104 = vector.broadcast %103 : vector<8x1xf32> to vector<8x32xf32>
    %105 = arith.mulf %94, %104 : vector<8x32xf32>
    %106 = arith.mulf %98, %100 : vector<8x1xf32>
    %107 = vector.broadcast %106 : vector<8x1xf32> to vector<8x32xf32>
    %108 = arith.mulf %38, %107 : vector<8x32xf32>
    %109 = arith.subf %105, %108 : vector<8x32xf32>
    %110 = arith.mulf %96, %102 : vector<8x1xf32>
    %111 = vector.broadcast %110 : vector<8x1xf32> to vector<8x32xf32>
    %112 = arith.mulf %38, %111 : vector<8x32xf32>
    %113 = arith.mulf %98, %102 : vector<8x1xf32>
    %114 = vector.broadcast %113 : vector<8x1xf32> to vector<8x32xf32>
    %115 = arith.mulf %94, %114 : vector<8x32xf32>
    %116 = arith.addf %112, %115 : vector<8x32xf32>
    %117 = arith.mulf %109, %109 : vector<8x32xf32>
    %118 = arith.mulf %116, %116 : vector<8x32xf32>
    %119 = arith.addf %117, %118 : vector<8x32xf32>
    %cst_46 = arith.constant 0.000000e+00 : f32
    %120 = vector.shape_cast %67 : vector<8x1xi1> to vector<8x1xi1>
    %121 = vector.broadcast %120 : vector<8x1xi1> to vector<8x32xi1>
    %122 = vector.broadcast %cst_46 : f32 to vector<8x32xf32>
    %123 = arith.select %121, %119, %122 : vector<8x32xi1>, vector<8x32xf32>
    %c0_47 = arith.constant 0 : index
    %c0_48 = arith.constant 0 : index
    %124 = vector.load %arg10[%c0_47, %c0_48] : memref<8x32xf32, #tpu.memory_space<vmem>>, vector<8x32xf32>
    %125 = vector.shape_cast %123 : vector<8x32xf32> to vector<1x8x32xf32>
    %cst_49 = arith.constant dense<0.000000e+00> : vector<8x32xf32>
    %126 = vector.multi_reduction <add>, %125, %cst_49 [0] : vector<1x8x32xf32> to vector<8x32xf32>
    %127 = arith.addf %124, %126 : vector<8x32xf32>
    %c0_50 = arith.constant 0 : index
    %c0_51 = arith.constant 0 : index
    %128 = vector.load %arg10[%c0_50, %c0_51] : memref<8x32xf32, #tpu.memory_space<vmem>>, vector<8x32xf32>
    tpu.vector_store %arg10[%c0_50, %c0_51], %127 {strides = array<i32>} : memref<8x32xf32, #tpu.memory_space<vmem>>, vector<8x32xf32>,
    %c0_52 = arith.constant 0 : index
    %c0_53 = arith.constant 0 : index
    %129 = vector.load %arg11[%c0_52, %c0_53] : memref<8x1xf32, #tpu.memory_space<vmem>>, vector<8x1xf32>
    %cst_54 = arith.constant 1.000000e+00 : f32
    %cst_55 = arith.constant 0.000000e+00 : f32
    %130 = vector.broadcast %cst_54 : f32 to vector<8x1xf32>
    %131 = vector.broadcast %cst_55 : f32 to vector<8x1xf32>
    %132 = arith.select %67, %130, %131 : vector<8x1xi1>, vector<8x1xf32>
    %133 = vector.shape_cast %132 : vector<8x1xf32> to vector<1x8x1xf32>
    %cst_56 = arith.constant dense<0.000000e+00> : vector<8x1xf32>
    %134 = vector.multi_reduction <add>, %133, %cst_56 [0] : vector<1x8x1xf32> to vector<8x1xf32>
    %135 = arith.addf %129, %134 : vector<8x1xf32>
    %c0_57 = arith.constant 0 : index
    %c0_58 = arith.constant 0 : index
    %136 = vector.load %arg11[%c0_57, %c0_58] : memref<8x1xf32, #tpu.memory_space<vmem>>, vector<8x1xf32>
    tpu.vector_store %arg11[%c0_57, %c0_58], %135 {strides = array<i32>} : memref<8x1xf32, #tpu.memory_space<vmem>>, vector<8x1xf32>,
    return
  }
  func.func @transform_0(%arg0: i32, %arg1: i32) -> (i32, i32) {
    %c1_i32 = arith.constant 1 : i32
    %0 = arith.muli %arg0, %c1_i32 : i32
    %1 = arith.addi %0, %arg1 : i32
    %c0_i32 = arith.constant 0 : i32
    %2 = arith.minsi %1, %c0_i32 : i32
    %c0_i32_0 = arith.constant 0 : i32
    %c0_i32_1 = arith.constant 0 : i32
    return %2, %c0_i32_0 : i32, i32
  }
  func.func @transform_1(%arg0: i32, %arg1: i32) -> (i32, i32) {
    %c1_i32 = arith.constant 1 : i32
    %0 = arith.muli %arg0, %c1_i32 : i32
    %1 = arith.addi %0, %arg1 : i32
    %c0_i32 = arith.constant 0 : i32
    %2 = arith.minsi %1, %c0_i32 : i32
    %c0_i32_0 = arith.constant 0 : i32
    %c0_i32_1 = arith.constant 0 : i32
    return %2, %c0_i32_0 : i32, i32
  }
  func.func @transform_2(%arg0: i32, %arg1: i32) -> (i32, i32) {
    %c1_i32 = arith.constant 1 : i32
    %0 = arith.muli %arg0, %c1_i32 : i32
    %1 = arith.addi %0, %arg1 : i32
    %c0_i32 = arith.constant 0 : i32
    %2 = arith.minsi %1, %c0_i32 : i32
    %c0_i32_0 = arith.constant 0 : i32
    %c0_i32_1 = arith.constant 0 : i32
    return %2, %c0_i32_0 : i32, i32
  }
  func.func @transform_3(%arg0: i32, %arg1: i32) -> (i32, i32) {
    %c1_i32 = arith.constant 1 : i32
    %0 = arith.muli %arg0, %c1_i32 : i32
    %1 = arith.addi %0, %arg1 : i32
    %c0_i32 = arith.constant 0 : i32
    %2 = arith.minsi %1, %c0_i32 : i32
    %c0_i32_0 = arith.constant 0 : i32
    %c0_i32_1 = arith.constant 0 : i32
    return %2, %c0_i32_0 : i32, i32
  }
  func.func @transform_4(%arg0: i32, %arg1: i32) -> (i32, i32) {
    %c0_i32 = arith.constant 0 : i32
    %c0_i32_0 = arith.constant 0 : i32
    return %arg0, %c0_i32 : i32, i32
  }
  func.func @transform_5(%arg0: i32, %arg1: i32) -> (i32, i32) {
    %c0_i32 = arith.constant 0 : i32
    %c0_i32_0 = arith.constant 0 : i32
    return %arg0, %c0_i32 : i32, i32
  }
  func.func @transform_6(%arg0: i32, %arg1: i32) -> (i32, i32) {
    %c0_i32 = arith.constant 0 : i32
    %c0_i32_0 = arith.constant 0 : i32
    return %arg0, %c0_i32 : i32, i32
  }
  func.func @transform_7(%arg0: i32, %arg1: i32) -> (i32, i32) {
    %c0_i32 = arith.constant 0 : i32
    %c0_i32_0 = arith.constant 0 : i32
    return %arg0, %c0_i32 : i32, i32
  }
  func.func @transform_8(%arg0: i32, %arg1: i32) -> (i32, i32) {
    %c0_i32 = arith.constant 0 : i32
    %c0_i32_0 = arith.constant 0 : i32
    return %arg0, %c0_i32 : i32, i32
  }
  func.func @transform_9(%arg0: i32, %arg1: i32) -> (i32, i32) {
    %c0_i32 = arith.constant 0 : i32
    %c0_i32_0 = arith.constant 0 : i32
    return %arg0, %c0_i32 : i32, i32
  }
}

</mosaic_0001>

<llo_original>
// kernel: tpu_custom_call.1
$region0: #{tpu_custom_call.1}
  #allocation0 [shape = 'u32[]', space=smem, size = 0x4, offset = 0x4, fixed_abs, tag = 'smem constant byte address 0x4 - core index']
  #allocation1 [shape = 'u32[144,128]{1,0:T(1,128)}', space=vmem, size = 0x12000, scoped, tag = 'internal scratch']
  %s0 = inlined_call_operand.hbm [shape: f32[8,32], index: 0, kind: input, shape index: {}]
  %s1 = inlined_call_operand.hbm [shape: f32[8,32], index: 1, kind: input, shape index: {}]
  %s2 = inlined_call_operand.hbm [shape: f32[8,32], index: 2, kind: input, shape index: {}]
  %s3 = inlined_call_operand.vmem [shape: f32[8,32], index: 3, kind: input, shape index: {}]
  %s4 = inlined_call_operand.hbm [shape: f32[16,32], index: 4, kind: output, shape index: {0}]
  %s5 = inlined_call_operand.hbm [shape: f32[16,32], index: 5, kind: output, shape index: {1}]
  %s6 = inlined_call_operand.hbm [shape: f32[16,32], index: 6, kind: output, shape index: {2}]
  %s7 = inlined_call_operand.hbm [shape: f32[16,32], index: 7, kind: output, shape index: {3}]
  %s8 = inlined_call_operand.hbm [shape: f32[16,32], index: 8, kind: output, shape index: {4}]
  %s9 = inlined_call_operand.vmem [shape: f32[16,1], index: 9, kind: output, shape index: {5}]
  %10 = xla_tuple %s4, %s5, %s6, %s7, %s8, %s9
  %s11 = sld [smem:[#allocation0]]
  $region105: #{tpu_custom_call.1} parent=0
    _
  %s13 = ssub.s32 1, %s11
  %s14 = scalar_select 0, %s13, %s11
  $region1: #{tpu_custom_call.1} parent=0
    #allocation2 [shape = 'u8[8192]{0}', space=vmem, size = 0x2000, scoped, tag = 'input window, operand 0']
    #allocation3 [shape = 's32[2]{0}', space=sflag, size = 0x8, scoped, tag = 'scoped memory for tpu_custom_call.1']
    #allocation4 [shape = 's32[2]{0}', space=sflag, size = 0x8, scoped, tag = 'scoped memory for tpu_custom_call.1']
    #allocation5 [shape = 'u8[8192]{0}', space=vmem, size = 0x2000, scoped, tag = 'input window, operand 1']
    #allocation6 [shape = 's32[2]{0}', space=sflag, size = 0x8, scoped, tag = 'scoped memory for tpu_custom_call.1']
    #allocation7 [shape = 'u8[8192]{0}', space=vmem, size = 0x2000, scoped, tag = 'input window, operand 2']
    #allocation8 [shape = 'u8[8192]{0}', space=vmem, size = 0x2000, scoped, tag = 'output window, operand 0']
    #allocation9 [shape = 'u8[8192]{0}', space=vmem, size = 0x2000, scoped, tag = 'output window, operand 1']
    #allocation10 [shape = 's32[2]{0}', space=sflag, size = 0x8, scoped, tag = 'scoped memory for tpu_custom_call.1']
    #allocation11 [shape = 'u8[8192]{0}', space=vmem, size = 0x2000, scoped, tag = 'output window, operand 2']
    #allocation12 [shape = 'u8[8192]{0}', space=vmem, size = 0x2000, scoped, tag = 'output window, operand 3']
    #allocation13 [shape = 's32[2]{0}', space=sflag, size = 0x8, scoped, tag = 'scoped memory for tpu_custom_call.1']
    #allocation14 [shape = 'u8[8192]{0}', space=vmem, size = 0x2000, scoped, tag = 'output window, operand 4']
    %15 = vsyncpa [#allocation3], 0
    %s16 = scalar_lea.sflag [#allocation3], 1
    %17 = vsyncpa %s16, 0
    %18 = vsyncpa [#allocation6], 0
    %s19 = scalar_lea.sflag [#allocation6], 1
    %20 = vsyncpa %s19, 0
    %21 = vsyncpa [#allocation4], 0
    %s22 = scalar_lea.sflag [#allocation4], 1
    %23 = vsyncpa %s22, 0
    %24 = vsyncpa [#allocation10], 0
    %s25 = scalar_lea.sflag [#allocation10], 1
    %26 = vsyncpa %s25, 0
    %27 = vsyncpa [#allocation13], 0
    %s28 = scalar_lea.sflag [#allocation13], 1
    %29 = vsyncpa %s28, 0
    loop: start=0, step=1, limit=4
    $region2: #{tpu_custom_call.1} parent=1 // loop_pre_header
      _
    $region3: #{tpu_custom_call.1} parent=1 // loop_header
      %s31 = sphi 0, %s35
      %p32 = scmp.ge.s32.totalorder %s31, 4
      %s38 = sphi 0, %s50
      %s39 = sphi 0, %s46
      %s40 = sphi 0, %s38
      %s41 = sphi 0, %s39
      %s42 = sphi 0, %s40
      %s43 = sphi 0, %s41
      %s59 = sphi 0, %s61
      %s62 = sphi 0, %s59
      %s63 = sphi 0, %s62
      %s79 = sphi 0, %s63
      %s91 = sphi 0, %s93
      %s94 = sphi 0, %s91
      %s95 = sphi 0, %s94
      %s111 = sphi 0, %s95
      %s123 = sphi 0, %s125
      %s126 = sphi 0, %s123
      %s127 = sphi 0, %s126
      %s143 = sphi 0, %s127
      %s155 = sphi 0, %s157
      %s158 = sphi 0, %s155
      %s159 = sphi 0, %s158
      %s175 = sphi 0, %s159
      %s181 = sphi 0, %s183
      %s184 = sphi 0, %s181
      %s185 = sphi 0, %s184
      %s201 = sphi 0, %s185
      %s207 = sphi 0, %s209
      %s210 = sphi 0, %s207
      %s211 = sphi 0, %s210
      %s227 = sphi 0, %s211
      %s233 = sphi 0, %s235
      %s236 = sphi 0, %s233
      %s237 = sphi 0, %s236
      %s253 = sphi 0, %s237
      %s259 = sphi 0, %s261
      %s262 = sphi 0, %s259
      %s263 = sphi 0, %s262
      %s279 = sphi 0, %s263
      %s285 = sphi 0, %s287
      %s288 = sphi 0, %s285
      %s289 = sphi 0, %s288
      %s305 = sphi 0, %s289
      %s311 = sphi 0, %s313
      %s314 = sphi 0, %s311
      %s315 = sphi 0, %s314
      %s331 = sphi 0, %s315
    $region4: #{tpu_custom_call.1} parent=1 // loop_header_branch
      %34 = sbr.rel (%p32) target = $region8
    $region5: #{tpu_custom_call.1} parent=1 // loop_body
      %s36 = ssub.s32 %s31, 1
      %s37 = ssub.s32 %s31, 2
      %s44 = sadd.s32 1, %s39
      %p45 = scmp.ge.s32.totalorder %s44, 1
      %s46 = scalar_select %p45, 0, %s44
      %s47 = sadd.s32 1, %s38
      %s48 = scalar_select %p45, %s47, %s38
      %p49 = scmp.ge.s32.totalorder %s48, 2
      %s50 = scalar_select %p49, 0, %s48
      %s51 = sadd.s32 %s38, %s39
      %p52 = scmp.lt.s32.totalorder %s51, 0
      %s53 = scalar_select %p52, %s51, 0
      %s54 = sadd.s32 %s50, %s46
      %p55 = scmp.lt.s32.totalorder %s54, 0
      %s56 = scalar_select %p55, %s54, 0
      %s57 = ssub.s32 %s53, %s56
      %p58 = scmp.eq.s32.totalorder %s57, 0
      %s60 = sadd.s32 %s59, 1
      %s61 = scalar_select %p58, %s59, %s60
      %p64 = pneg %p58
      %p65 = scmp.eq.s32.totalorder %s31, 1
      %p66 = por %p64, %p65
      %p67 = scmp.ne.s32.totalorder %s59, %s62
      %p68 = scmp.eq.s32.totalorder %s31, 0
      %p69 = por %p67, %p68
      %p70 = scmp.ne.s32.totalorder %s59, %s62
      %p71 = scmp.eq.s32.totalorder %s36, 1
      %p72 = por %p70, %p71
      %p73 = scmp.ne.s32.totalorder %s62, %s63
      %p74 = scmp.eq.s32.totalorder %s36, 0
      %p75 = por %p73, %p74
      %p76 = scmp.ne.s32.totalorder %s62, %s63
      %p77 = scmp.eq.s32.totalorder %s37, 1
      %p78 = por %p76, %p77
      %p80 = scmp.ne.s32.totalorder %s63, %s79
      %p81 = scmp.eq.s32.totalorder %s37, 0
      %p82 = por %p80, %p81
      %s83 = sadd.s32 %s38, %s39
      %p84 = scmp.lt.s32.totalorder %s83, 0
      %s85 = scalar_select %p84, %s83, 0
      %s86 = sadd.s32 %s50, %s46
      %p87 = scmp.lt.s32.totalorder %s86, 0
      %s88 = scalar_select %p87, %s86, 0
      %s89 = ssub.s32 %s85, %s88
      %p90 = scmp.eq.s32.totalorder %s89, 0
      %s92 = sadd.s32 %s91, 1
      %s93 = scalar_select %p90, %s91, %s92
      %p96 = pneg %p90
      %p97 = scmp.eq.s32.totalorder %s31, 1
      %p98 = por %p96, %p97
      %p99 = scmp.ne.s32.totalorder %s91, %s94
      %p100 = scmp.eq.s32.totalorder %s31, 0
      %p101 = por %p99, %p100
      %p102 = scmp.ne.s32.totalorder %s91, %s94
      %p103 = scmp.eq.s32.totalorder %s36, 1
      %p104 = por %p102, %p103
      %p105 = scmp.ne.s32.totalorder %s94, %s95
      %p106 = scmp.eq.s32.totalorder %s36, 0
      %p107 = por %p105, %p106
      %p108 = scmp.ne.s32.totalorder %s94, %s95
      %p109 = scmp.eq.s32.totalorder %s37, 1
      %p110 = por %p108, %p109
      %p112 = scmp.ne.s32.totalorder %s95, %s111
      %p113 = scmp.eq.s32.totalorder %s37, 0
      %p114 = por %p112, %p113
      %s115 = sadd.s32 %s38, %s39
      %p116 = scmp.lt.s32.totalorder %s115, 0
      %s117 = scalar_select %p116, %s115, 0
      %s118 = sadd.s32 %s50, %s46
      %p119 = scmp.lt.s32.totalorder %s118, 0
      %s120 = scalar_select %p119, %s118, 0
      %s121 = ssub.s32 %s117, %s120
      %p122 = scmp.eq.s32.totalorder %s121, 0
      %s124 = sadd.s32 %s123, 1
      %s125 = scalar_select %p122, %s123, %s124
      %p128 = pneg %p122
      %p129 = scmp.eq.s32.totalorder %s31, 1
      %p130 = por %p128, %p129
      %p131 = scmp.ne.s32.totalorder %s123, %s126
      %p132 = scmp.eq.s32.totalorder %s31, 0
      %p133 = por %p131, %p132
      %p134 = scmp.ne.s32.totalorder %s123, %s126
      %p135 = scmp.eq.s32.totalorder %s36, 1
      %p136 = por %p134, %p135
      %p137 = scmp.ne.s32.totalorder %s126, %s127
      %p138 = scmp.eq.s32.totalorder %s36, 0
      %p139 = por %p137, %p138
      %p140 = scmp.ne.s32.totalorder %s126, %s127
      %p141 = scmp.eq.s32.totalorder %s37, 1
      %p142 = por %p140, %p141
      %p144 = scmp.ne.s32.totalorder %s127, %s143
      %p145 = scmp.eq.s32.totalorder %s37, 0
      %p146 = por %p144, %p145
      %s147 = sadd.s32 %s38, %s39
      %p148 = scmp.lt.s32.totalorder %s147, 0
      %s149 = scalar_select %p148, %s147, 0
      %s150 = sadd.s32 %s50, %s46
      %p151 = scmp.lt.s32.totalorder %s150, 0
      %s152 = scalar_select %p151, %s150, 0
      %s153 = ssub.s32 %s149, %s152
      %p154 = scmp.eq.s32.totalorder %s153, 0
      %s156 = sadd.s32 %s155, 1
      %s157 = scalar_select %p154, %s155, %s156
      %p160 = pneg %p154
      %p161 = scmp.eq.s32.totalorder %s31, 1
      %p162 = por %p160, %p161
      %p163 = scmp.ne.s32.totalorder %s155, %s158
      %p164 = scmp.eq.s32.totalorder %s31, 0
      %p165 = por %p163, %p164
      %p166 = scmp.ne.s32.totalorder %s155, %s158
      %p167 = scmp.eq.s32.totalorder %s36, 1
      %p168 = por %p166, %p167
      %p169 = scmp.ne.s32.totalorder %s158, %s159
      %p170 = scmp.eq.s32.totalorder %s36, 0
      %p171 = por %p169, %p170
      %p172 = scmp.ne.s32.totalorder %s158, %s159
      %p173 = scmp.eq.s32.totalorder %s37, 1
      %p174 = por %p172, %p173
      %p176 = scmp.ne.s32.totalorder %s159, %s175
      %p177 = scmp.eq.s32.totalorder %s37, 0
      %p178 = por %p176, %p177
      %s179 = ssub.s32 %s38, %s50
      %p180 = scmp.eq.s32.totalorder %s179, 0
      %s182 = sadd.s32 %s181, 1
      %s183 = scalar_select %p180, %s181, %s182
      %p186 = pneg %p180
      %p187 = scmp.eq.s32.totalorder %s31, 1
      %p188 = por %p186, %p187
      %p189 = scmp.ne.s32.totalorder %s181, %s184
      %p190 = scmp.eq.s32.totalorder %s31, 0
      %p191 = por %p189, %p190
      %p192 = scmp.ne.s32.totalorder %s181, %s184
      %p193 = scmp.eq.s32.totalorder %s36, 1
      %p194 = por %p192, %p193
      %p195 = scmp.ne.s32.totalorder %s184, %s185
      %p196 = scmp.eq.s32.totalorder %s36, 0
      %p197 = por %p195, %p196
      %p198 = scmp.ne.s32.totalorder %s184, %s185
      %p199 = scmp.eq.s32.totalorder %s37, 1
      %p200 = por %p198, %p199
      %p202 = scmp.ne.s32.totalorder %s185, %s201
      %p203 = scmp.eq.s32.totalorder %s37, 0
      %p204 = por %p202, %p203
      %s205 = ssub.s32 %s38, %s50
      %p206 = scmp.eq.s32.totalorder %s205, 0
      %s208 = sadd.s32 %s207, 1
      %s209 = scalar_select %p206, %s207, %s208
      %p212 = pneg %p206
      %p213 = scmp.eq.s32.totalorder %s31, 1
      %p214 = por %p212, %p213
      %p215 = scmp.ne.s32.totalorder %s207, %s210
      %p216 = scmp.eq.s32.totalorder %s31, 0
      %p217 = por %p215, %p216
      %p218 = scmp.ne.s32.totalorder %s207, %s210
      %p219 = scmp.eq.s32.totalorder %s36, 1
      %p220 = por %p218, %p219
      %p221 = scmp.ne.s32.totalorder %s210, %s211
      %p222 = scmp.eq.s32.totalorder %s36, 0
      %p223 = por %p221, %p222
      %p224 = scmp.ne.s32.totalorder %s210, %s211
      %p225 = scmp.eq.s32.totalorder %s37, 1
      %p226 = por %p224, %p225
      %p228 = scmp.ne.s32.totalorder %s211, %s227
      %p229 = scmp.eq.s32.totalorder %s37, 0
      %p230 = por %p228, %p229
      %s231 = ssub.s32 %s38, %s50
      %p232 = scmp.eq.s32.totalorder %s231, 0
      %s234 = sadd.s32 %s233, 1
      %s235 = scalar_select %p232, %s233, %s234
      %p238 = pneg %p232
      %p239 = scmp.eq.s32.totalorder %s31, 1
      %p240 = por %p238, %p239
      %p241 = scmp.ne.s32.totalorder %s233, %s236
      %p242 = scmp.eq.s32.totalorder %s31, 0
      %p243 = por %p241, %p242
      %p244 = scmp.ne.s32.totalorder %s233, %s236
      %p245 = scmp.eq.s32.totalorder %s36, 1
      %p246 = por %p244, %p245
      %p247 = scmp.ne.s32.totalorder %s236, %s237
      %p248 = scmp.eq.s32.totalorder %s36, 0
      %p249 = por %p247, %p248
      %p250 = scmp.ne.s32.totalorder %s236, %s237
      %p251 = scmp.eq.s32.totalorder %s37, 1
      %p252 = por %p250, %p251
      %p254 = scmp.ne.s32.totalorder %s237, %s253
      %p255 = scmp.eq.s32.totalorder %s37, 0
      %p256 = por %p254, %p255
      %s257 = ssub.s32 %s38, %s50
      %p258 = scmp.eq.s32.totalorder %s257, 0
      %s260 = sadd.s32 %s259, 1
      %s261 = scalar_select %p258, %s259, %s260
      %p264 = pneg %p258
      %p265 = scmp.eq.s32.totalorder %s31, 1
      %p266 = por %p264, %p265
      %p267 = scmp.ne.s32.totalorder %s259, %s262
      %p268 = scmp.eq.s32.totalorder %s31, 0
      %p269 = por %p267, %p268
      %p270 = scmp.ne.s32.totalorder %s259, %s262
      %p271 = scmp.eq.s32.totalorder %s36, 1
      %p272 = por %p270, %p271
      %p273 = scmp.ne.s32.totalorder %s262, %s263
      %p274 = scmp.eq.s32.totalorder %s36, 0
      %p275 = por %p273, %p274
      %p276 = scmp.ne.s32.totalorder %s262, %s263
      %p277 = scmp.eq.s32.totalorder %s37, 1
      %p278 = por %p276, %p277
      %p280 = scmp.ne.s32.totalorder %s263, %s279
      %p281 = scmp.eq.s32.totalorder %s37, 0
      %p282 = por %p280, %p281
      %s283 = ssub.s32 %s38, %s50
      %p284 = scmp.eq.s32.totalorder %s283, 0
      %s286 = sadd.s32 %s285, 1
      %s287 = scalar_select %p284, %s285, %s286
      %p290 = pneg %p284
      %p291 = scmp.eq.s32.totalorder %s31, 1
      %p292 = por %p290, %p291
      %p293 = scmp.ne.s32.totalorder %s285, %s288
      %p294 = scmp.eq.s32.totalorder %s31, 0
      %p295 = por %p293, %p294
      %p296 = scmp.ne.s32.totalorder %s285, %s288
      %p297 = scmp.eq.s32.totalorder %s36, 1
      %p298 = por %p296, %p297
      %p299 = scmp.ne.s32.totalorder %s288, %s289
      %p300 = scmp.eq.s32.totalorder %s36, 0
      %p301 = por %p299, %p300
      %p302 = scmp.ne.s32.totalorder %s288, %s289
      %p303 = scmp.eq.s32.totalorder %s37, 1
      %p304 = por %p302, %p303
      %p306 = scmp.ne.s32.totalorder %s289, %s305
      %p307 = scmp.eq.s32.totalorder %s37, 0
      %p308 = por %p306, %p307
      %s309 = ssub.s32 %s38, %s50
      %p310 = scmp.eq.s32.totalorder %s309, 0
      %s312 = sadd.s32 %s311, 1
      %s313 = scalar_select %p310, %s311, %s312
      %p316 = pneg %p310
      %p317 = scmp.eq.s32.totalorder %s31, 1
      %p318 = por %p316, %p317
      %p319 = scmp.ne.s32.totalorder %s311, %s314
      %p320 = scmp.eq.s32.totalorder %s31, 0
      %p321 = por %p319, %p320
      %p322 = scmp.ne.s32.totalorder %s311, %s314
      %p323 = scmp.eq.s32.totalorder %s36, 1
      %p324 = por %p322, %p323
      %p325 = scmp.ne.s32.totalorder %s314, %s315
      %p326 = scmp.eq.s32.totalorder %s36, 0
      %p327 = por %p325, %p326
      %p328 = scmp.ne.s32.totalorder %s314, %s315
      %p329 = scmp.eq.s32.totalorder %s37, 1
      %p330 = por %p328, %p329
      %p332 = scmp.ne.s32.totalorder %s315, %s331
      %p333 = scmp.eq.s32.totalorder %s37, 0
      %p334 = por %p332, %p333
      %p335 = scmp.le.s32.totalorder 1, %s31
      %p336 = scmp.lt.s32.totalorder %s31, 3
      %p337 = pnand %p335, %p336
      %p338 = pneg %p337
      // Predicated region
      $region9: #{tpu_custom_call.1} parent=5 // pred_check
        _
      $region10: #{tpu_custom_call.1} parent=5 // pred_check_branch
        %340 = sbr.rel (%p337) target = $region12
      $region11: #{tpu_custom_call.1} parent=5 // pred_region
        %s341 = ssub.s32 %s31, 1
      $region12: #{tpu_custom_call.1} parent=5 // pred_fallthru
        _
      %p342 = scmp.lt.s32.totalorder %s31, 2
      // Predicated region
      $region13: #{tpu_custom_call.1} parent=5 // pred_check
        %p343 = pneg %p342
      $region14: #{tpu_custom_call.1} parent=5 // pred_check_branch
        %345 = sbr.rel (%p343) target = $region16
      $region15: #{tpu_custom_call.1} parent=5 // pred_region
        // Predicated region
        $region17: #{tpu_custom_call.1} parent=15 // pred_check
          %p346 = pneg %p69
        $region18: #{tpu_custom_call.1} parent=15 // pred_check_branch
          %348 = sbr.rel (%p346) target = $region20
        $region19: #{tpu_custom_call.1} parent=15 // pred_region
          %s349 = sand.u32 %s59, 1
          %s350 = scalar_lea.sflag [#allocation3], %s349
          %s351 = sand.u32 %s59, 1
          %s352 = smul.addr %s351, 8
          %s353 = scalar_lea.vmem [#allocation2], %s352
          %s354 = sadd.s32 %s38, %s39
          %p355 = scmp.lt.s32.totalorder %s354, 0
          %s356 = scalar_select %p355, %s354, 0
          %s358 = ssub.s32 128, 128
          %359 = vsyncadd %s350, %s358
          %s360 = smul.addr %s356, 128
          %s361 = scalar_lea.hbm %s0, %s360
          %s363 = sshll.u32 %s353, 4
          %s364 = int_to_ptr.vmem [resolvable:$true] %s363
          %366 = dma.hbm_to_vmem [thread:$0]  %s361, 128, %s364, %s350
        $region20: #{tpu_custom_call.1} parent=15 // pred_fallthru
          _
        // Predicated region
        $region21: #{tpu_custom_call.1} parent=15 // pred_check
          %p367 = pneg %p101
        $region22: #{tpu_custom_call.1} parent=15 // pred_check_branch
          %369 = sbr.rel (%p367) target = $region24
        $region23: #{tpu_custom_call.1} parent=15 // pred_region
          %s370 = sand.u32 %s31, 1
          %s371 = scalar_lea.sflag [#allocation6], %s370
          %s372 = sand.u32 %s91, 1
          %s373 = smul.addr %s372, 8
          %s374 = scalar_lea.vmem [#allocation5], %s373
          %s375 = sadd.s32 %s38, %s39
          %p376 = scmp.lt.s32.totalorder %s375, 0
          %s377 = scalar_select %p376, %s375, 0
          %s379 = ssub.s32 128, 128
          %380 = vsyncadd %s371, %s379
          %s381 = smul.addr %s377, 128
          %s382 = scalar_lea.hbm %s1, %s381
          %s384 = sshll.u32 %s374, 4
          %s385 = int_to_ptr.vmem [resolvable:$true] %s384
          %387 = dma.hbm_to_vmem [thread:$0]  %s382, 128, %s385, %s371
        $region24: #{tpu_custom_call.1} parent=15 // pred_fallthru
          _
        // Predicated region
        $region25: #{tpu_custom_call.1} parent=15 // pred_check
          %p388 = pneg %p133
        $region26: #{tpu_custom_call.1} parent=15 // pred_check_branch
          %390 = sbr.rel (%p388) target = $region28
        $region27: #{tpu_custom_call.1} parent=15 // pred_region
          %s391 = sand.u32 %s31, 1
          %s392 = scalar_lea.sflag [#allocation6], %s391
          %s393 = sand.u32 %s123, 1
          %s394 = smul.addr %s393, 8
          %s395 = scalar_lea.vmem [#allocation7], %s394
          %s396 = sadd.s32 %s38, %s39
          %p397 = scmp.lt.s32.totalorder %s396, 0
          %s398 = scalar_select %p397, %s396, 0
          %s400 = ssub.s32 128, 128
          %401 = vsyncadd %s392, %s400
          %s402 = smul.addr %s398, 128
          %s403 = scalar_lea.hbm %s2, %s402
          %s405 = sshll.u32 %s395, 4
          %s406 = int_to_ptr.vmem [resolvable:$true] %s405
          %408 = dma.hbm_to_vmem [thread:$0]  %s403, 128, %s406, %s392
        $region28: #{tpu_custom_call.1} parent=15 // pred_fallthru
          _
        // Predicated region
        $region29: #{tpu_custom_call.1} parent=15 // pred_check
          %p409 = pneg %p165
        $region30: #{tpu_custom_call.1} parent=15 // pred_check_branch
          %411 = sbr.rel (%p409) target = $region32
        $region31: #{tpu_custom_call.1} parent=15 // pred_region
          %s412 = sadd.s32 %s38, %s39
          %p413 = scmp.lt.s32.totalorder %s412, 0
          %s414 = scalar_select %p413, %s412, 0
          %p415 = scmp.lt.s32.totalorder %s414, 0
          %s416 = scalar_select %p415, %s414, 0
          %s417 = smul.addr %s416, 8
          %s418 = scalar_lea.vmem %s3, %s417
          %s419 = sadd.s32 %s38, %s39
          %p420 = scmp.lt.s32.totalorder %s419, 0
          %s421 = scalar_select %p420, %s419, 0
        $region32: #{tpu_custom_call.1} parent=15 // pred_fallthru
          _
      $region16: #{tpu_custom_call.1} parent=5 // pred_fallthru
        _
      %p422 = scmp.le.s32.totalorder 1, %s31
      %p423 = scmp.lt.s32.totalorder %s31, 3
      %p424 = pnand %p422, %p423
      %p425 = pneg %p424
      // Predicated region
      $region33: #{tpu_custom_call.1} parent=5 // pred_check
        _
      $region34: #{tpu_custom_call.1} parent=5 // pred_check_branch
        %427 = sbr.rel (%p424) target = $region36
      $region35: #{tpu_custom_call.1} parent=5 // pred_region
        %s428 = ssub.s32 %s31, 1
        %s429 = sand.u32 %s62, 1
        %s430 = scalar_lea.sflag [#allocation3], %s429
        %s431 = sand.u32 %s62, 1
        %s432 = smul.addr %s431, 8
        %s433 = scalar_lea.vmem [#allocation2], %s432
        // Predicated region
        $region37: #{tpu_custom_call.1} parent=35 // pred_check
          %p434 = pneg %p75
        $region38: #{tpu_custom_call.1} parent=35 // pred_check_branch
          %436 = sbr.rel (%p434) target = $region40
        $region39: #{tpu_custom_call.1} parent=35 // pred_region
          %437 = dma.done %s430, 128
        $region40: #{tpu_custom_call.1} parent=35 // pred_fallthru
          _
        %s438 = sand.u32 %s36, 1
        %s439 = scalar_lea.sflag [#allocation6], %s438
        %s440 = sand.u32 %s94, 1
        %s441 = smul.addr %s440, 8
        %s442 = scalar_lea.vmem [#allocation5], %s441
        // Predicated region
        $region41: #{tpu_custom_call.1} parent=35 // pred_check
          %p443 = pneg %p107
        $region42: #{tpu_custom_call.1} parent=35 // pred_check_branch
          %445 = sbr.rel (%p443) target = $region44
        $region43: #{tpu_custom_call.1} parent=35 // pred_region
          %446 = dma.done %s439, 128
        $region44: #{tpu_custom_call.1} parent=35 // pred_fallthru
          _
        %s447 = sand.u32 %s36, 1
        %s448 = scalar_lea.sflag [#allocation6], %s447
        %s449 = sand.u32 %s126, 1
        %s450 = smul.addr %s449, 8
        %s451 = scalar_lea.vmem [#allocation7], %s450
        // Predicated region
        $region45: #{tpu_custom_call.1} parent=35 // pred_check
          %p452 = pneg %p139
        $region46: #{tpu_custom_call.1} parent=35 // pred_check_branch
          %454 = sbr.rel (%p452) target = $region48
        $region47: #{tpu_custom_call.1} parent=35 // pred_region
          %455 = dma.done %s448, 128
        $region48: #{tpu_custom_call.1} parent=35 // pred_fallthru
          _
        %s456 = sand.u32 %s62, 1
        %s457 = scalar_lea.sflag [#allocation3], %s456
        %s458 = sand.u32 %s62, 1
        %s459 = smul.addr %s458, 8
        %s460 = scalar_lea.vmem [#allocation2], %s459
        %p461 = pneg %p75
        %p462 = pneg %p72
        %s463 = sand.u32 %s36, 1
        %s464 = scalar_lea.sflag [#allocation6], %s463
        %s465 = sand.u32 %s94, 1
        %s466 = smul.addr %s465, 8
        %s467 = scalar_lea.vmem [#allocation5], %s466
        %p468 = pneg %p107
        %p469 = pneg %p104
        %s470 = sand.u32 %s36, 1
        %s471 = scalar_lea.sflag [#allocation6], %s470
        %s472 = sand.u32 %s126, 1
        %s473 = smul.addr %s472, 8
        %s474 = scalar_lea.vmem [#allocation7], %s473
        %p475 = pneg %p139
        %p476 = pneg %p136
        %s477 = sadd.s32 %s40, %s41
        %p478 = scmp.lt.s32.totalorder %s477, 0
        %s479 = scalar_select %p478, %s477, 0
        %p480 = scmp.lt.s32.totalorder %s479, 0
        %s481 = scalar_select %p480, %s479, 0
        %s482 = smul.addr %s481, 8
        %s483 = scalar_lea.vmem %s3, %s482
        %p484 = pneg %p171
        %p485 = pneg %p168
        %p486 = pneg %p197
        %p487 = pneg %p194
        %s488 = sand.u32 %s184, 1
        %s489 = scalar_lea.sflag [#allocation4], %s488
        %s490 = sand.u32 %s184, 1
        %s491 = smul.addr %s490, 8
        %s492 = scalar_lea.vmem [#allocation8], %s491
        %p493 = pneg %p223
        %p494 = pneg %p220
        %s495 = sand.u32 %s36, 1
        %s496 = scalar_lea.sflag [#allocation10], %s495
        %s497 = sand.u32 %s210, 1
        %s498 = smul.addr %s497, 8
        %s499 = scalar_lea.vmem [#allocation9], %s498
        %p500 = pneg %p249
        %p501 = pneg %p246
        %s502 = sand.u32 %s36, 1
        %s503 = scalar_lea.sflag [#allocation10], %s502
        %s504 = sand.u32 %s236, 1
        %s505 = smul.addr %s504, 8
        %s506 = scalar_lea.vmem [#allocation11], %s505
        %p507 = pneg %p275
        %p508 = pneg %p272
        %s509 = sand.u32 %s36, 1
        %s510 = scalar_lea.sflag [#allocation13], %s509
        %s511 = sand.u32 %s262, 1
        %s512 = smul.addr %s511, 8
        %s513 = scalar_lea.vmem [#allocation12], %s512
        %p514 = pneg %p301
        %p515 = pneg %p298
        %s516 = sand.u32 %s36, 1
        %s517 = scalar_lea.sflag [#allocation13], %s516
        %s518 = sand.u32 %s288, 1
        %s519 = smul.addr %s518, 8
        %s520 = scalar_lea.vmem [#allocation14], %s519
        %p521 = pneg %p327
        %p522 = pneg %p324
        %p523 = scmp.lt.s32.totalorder %s40, 1
        %s524 = scalar_select %p523, %s40, 1
        %s525 = smul.addr %s524, 8
        %s526 = scalar_lea.vmem %s9, %s525
        %s527 = sadd.s32 %s40, %s41
        %p528 = scmp.lt.s32.totalorder %s527, 0
        %s529 = scalar_select %p528, %s527, 0
        %s530 = sadd.s32 %s40, %s41
        %p531 = scmp.lt.s32.totalorder %s530, 0
        %s532 = scalar_select %p531, %s530, 0
        %s533 = sadd.s32 %s40, %s41
        %p534 = scmp.lt.s32.totalorder %s533, 0
        %s535 = scalar_select %p534, %s533, 0
        %s536 = sadd.s32 %s40, %s41
        %p537 = scmp.lt.s32.totalorder %s536, 0
        %s538 = scalar_select %p537, %s536, 0
        %p539 = scmp.lt.s32.totalorder %s538, 0
        %s540 = scalar_select %p539, %s538, 0
        %s541 = smul.addr %s540, 8
        %s542 = scalar_lea.vmem %s3, %s541
        %s543 = sadd.s32 %s40, %s41
        %p544 = scmp.lt.s32.totalorder %s543, 0
        %s545 = scalar_select %p544, %s543, 0
        %p546 = scmp.lt.s32.totalorder %s40, 1
        %s547 = scalar_select %p546, %s40, 1
        %s548 = smul.addr %s547, 8
        %s549 = scalar_lea.vmem %s9, %s548
        %p550 = scmp.eq.s32.totalorder %s41, 0
        // Predicated region
        $region49: #{tpu_custom_call.1} parent=35 // pred_check
          %p551 = pneg %p550
        $region50: #{tpu_custom_call.1} parent=35 // pred_check_branch
          %553 = sbr.rel (%p551) target = $region52
        $region51: #{tpu_custom_call.1} parent=35 // pred_region
          %vm554 = vcmask 261120
          %555 = vst.msk [vmem:[%s492] sm:$0xff] %vm554, 0.0
          %556 = vst.msk [vmem:[%s499] sm:$0xff] %vm554, 0.0
          %557 = vst.msk [vmem:[%s506] sm:$0xff] %vm554, 0.0
          %558 = vst.msk [vmem:[%s513] sm:$0xff] %vm554, 0.0
          %559 = vst.msk [vmem:[%s520] sm:$0xff] %vm554, 0.0
          %vm560 = vcmask 7168
          %561 = vst.msk [vmem:[%s549] sm:$0xff] %vm560, 0.0
        $region52: #{tpu_custom_call.1} parent=35 // pred_fallthru
          _
        %s562 = sadd.s32 %s40, %s41
        %s563 = smul.u32 %s562, 8
        %v564 = vlaneseq
        %v565 = vshrl.u32 %v564, 7
        %v566 = vstv %s563
        %v567 = vadd.s32 %v566, %v565
        %vm568 = vcmp.lt.s32.totalorder %v567, 8
        %v569 = vld [vmem:[%s433] sm:$0xff]
        %v570 = vld [vmem:[%s442] sm:$0xff]
        %v571 = vld [vmem:[%s451] sm:$0xff]
        %v572 = vld [vmem:[%s542] sm:$0xff]
        %v573 = vsub.f32 %v569, %v570
        %v574 = vsel %vm568, 1, 0
        %vm575 = vcmp.eq.s32.totalorder %v574, 1
        %v576 = vsel %vm575, %v573, 0.0
        %v577 = vsub.f32 %v571, %v572
        %v578 = vsel %vm575, %v577, 0.0
        %v579 = vmul.f32 %v576, %v576
        %vm580 = vcmask 261120
        %v581 = vsel %vm580, %v579, 0.0
        %582 = vadd.xlane.f32.xlu0 %v581
        %v583 = vpop.xlane.xlu0 %582
        %v584 = vmul.f32 %v578, %v578
        %v585 = vsel %vm580, %v584, 0.0
        %586 = vadd.xlane.f32.xlu0 %v585
        %v587 = vpop.xlane.xlu0 %586
        %v588 = vmax.f32 %v583, 1e-24
        %v589 = vrsqrt.pop %v588
        %v590 = vmax.f32 %v587, 1e-24
        %v591 = vrsqrt.pop %v590
        %v592 = vmul.f32 %v576, %v589
        %v593 = vmul.f32 %v578, %v591
        %v594 = vld [vmem:[%s492] sm:$0xff]
        %v595 = vmul.f32 %v592, %v593
        %v596 = vadd.f32 %v595, 0.0
        %v597 = vadd.f32 %v594, %v596
        %598 = vst.msk [vmem:[%s492] sm:$0xff] %vm580, %v597
        %v599 = vld [vmem:[%s499] sm:$0xff]
        %v600 = vmul.f32 %v592, %v592
        %v601 = vadd.f32 %v600, 0.0
        %v602 = vadd.f32 %v599, %v601
        %603 = vst.msk [vmem:[%s499] sm:$0xff] %vm580, %v602
        %v604 = vld [vmem:[%s506] sm:$0xff]
        %v605 = vmul.f32 %v593, %v593
        %v606 = vadd.f32 %v605, 0.0
        %v607 = vadd.f32 %v604, %v606
        %608 = vst.msk [vmem:[%s506] sm:$0xff] %vm580, %v607
        %v609 = vsub.f32 %v576, %v578
        %v610 = vld [vmem:[%s513] sm:$0xff]
        %v611 = vmul.f32 %v609, %v609
        %v612 = vadd.f32 %v611, 0.0
        %v613 = vadd.f32 %v610, %v612
        %614 = vst.msk [vmem:[%s513] sm:$0xff] %vm580, %v613
        %vm615 = vcmp.gt.f32.partialorder %v583, 1e-16
        %v616 = vrsqrt.pop %v587
        %v617 = vmul.f32 %v592, %v578
        %v618 = vsel %vm580, %v617, 0.0
        %619 = vadd.xlane.f32.xlu0 %v618
        %v620 = vpop.xlane.xlu0 %619
        %v621 = vmul.f32 %v620, %v616
        %v622 = vmax.f32 %v621, -1.0
        %v623 = vmin.f32 %v622, 1.0
        %v624 = vmul.f32 %v623, %v623
        %v625 = vsub.f32 1.0, %v624
        %v626 = vmax.f32 %v625, 0.0
        %v627 = vmin.f32 %v626, 1.0
        %v628 = vrsqrt.pop %v627
        %v629 = vmul.f32 %v627, %v628
        %vm630 = vcmp.eq.f32.partialorder %v627, inf
        %v631 = vsel %vm630, %v627, %v629
        %vm632 = vcmp.eq.f32.partialorder %v627, 0.0
        %v633 = vand.u32 %v627, 2147483648
        %v634 = vsel %vm632, %v633, %v631
        %v635 = vsub.f32 %v623, 1.0
        %v636 = vmul.f32 %v592, %v620
        %v637 = vsub.f32 %v578, %v636
        %v638 = vmul.f32 %v620, %v620
        %v639 = vsub.f32 %v587, %v638
        %v640 = vrsqrt.pop %v639
        %v641 = vmul.f32 %v637, %v640
        %v642 = vsel %vm580, %v592, 0.0
        %643 = vadd.xlane.f32.xlu0 %v642
        %v644 = vpop.xlane.xlu0 %643
        %v645 = vsel %vm580, %v641, 0.0
        %646 = vadd.xlane.f32.xlu0 %v645
        %v647 = vpop.xlane.xlu0 %646
        %v648 = vmul.f32 %v634, 0.83666
        %v649 = vmul.f32 %v635, 0.5477226
        %v650 = vmul.f32 %v644, %v648
        %v651 = vmul.f32 %v641, %v650
        %v652 = vmul.f32 %v647, %v648
        %v653 = vmul.f32 %v592, %v652
        %v654 = vsub.f32 %v651, %v653
        %v655 = vmul.f32 %v644, %v649
        %v656 = vmul.f32 %v592, %v655
        %v657 = vmul.f32 %v647, %v649
        %v658 = vmul.f32 %v641, %v657
        %v659 = vadd.f32 %v656, %v658
        %v660 = vmul.f32 %v654, %v654
        %v661 = vmul.f32 %v659, %v659
        %v662 = vadd.f32 %v660, %v661
        %v663 = vsel %vm615, 1, 0
        %vm664 = vcmp.eq.s32.totalorder %v663, 1
        %v665 = vsel %vm664, %v662, 0.0
        %v666 = vld [vmem:[%s520] sm:$0xff]
        %v667 = vadd.f32 %v665, 0.0
        %v668 = vadd.f32 %v666, %v667
        %669 = vst.msk [vmem:[%s520] sm:$0xff] %vm580, %v668
        %v670 = vld [vmem:[%s549] sm:$0xff]
        %v671 = vsel %vm615, 1.0, 0.0
        %v672 = vadd.f32 %v671, 0.0
        %v673 = vadd.f32 %v670, %v672
        %vm674 = vcmask 7168
        %675 = vst.msk [vmem:[%s549] sm:$0xff] %vm674, %v673
        %s676 = sand.u32 %s184, 1
        %s677 = scalar_lea.sflag [#allocation4], %s676
        %s678 = sand.u32 %s184, 1
        %s679 = smul.addr %s678, 8
        %s680 = scalar_lea.vmem [#allocation8], %s679
        %s681 = sand.u32 %s36, 1
        %s682 = scalar_lea.sflag [#allocation10], %s681
        %s683 = sand.u32 %s210, 1
        %s684 = smul.addr %s683, 8
        %s685 = scalar_lea.vmem [#allocation9], %s684
        %s686 = sand.u32 %s36, 1
        %s687 = scalar_lea.sflag [#allocation10], %s686
        %s688 = sand.u32 %s236, 1
        %s689 = smul.addr %s688, 8
        %s690 = scalar_lea.vmem [#allocation11], %s689
        %s691 = sand.u32 %s36, 1
        %s692 = scalar_lea.sflag [#allocation13], %s691
        %s693 = sand.u32 %s262, 1
        %s694 = smul.addr %s693, 8
        %s695 = scalar_lea.vmem [#allocation12], %s694
        %s696 = sand.u32 %s36, 1
        %s697 = scalar_lea.sflag [#allocation13], %s696
        %s698 = sand.u32 %s288, 1
        %s699 = smul.addr %s698, 8
        %s700 = scalar_lea.vmem [#allocation14], %s699
        %p701 = scmp.lt.s32.totalorder %s40, 1
        %s702 = scalar_select %p701, %s40, 1
        %s703 = smul.addr %s702, 8
        %s704 = scalar_lea.vmem %s9, %s703
        // Predicated region
        $region53: #{tpu_custom_call.1} parent=35 // pred_check
          %p705 = pneg %p194
        $region54: #{tpu_custom_call.1} parent=35 // pred_check_branch
          %707 = sbr.rel (%p705) target = $region56
        $region55: #{tpu_custom_call.1} parent=35 // pred_region
          %s709 = ssub.s32 128, 128
          %710 = vsyncadd %s677, %s709
          %s711 = smul.addr %s40, 128
          %s712 = scalar_lea.hbm %s4, %s711
          %s714 = sshll.u32 %s680, 4
          %s715 = int_to_ptr.vmem [resolvable:$true] %s714
          %717 = dma.vmem_to_hbm [thread:$0]  %s715, 128, %s712, %s677
        $region56: #{tpu_custom_call.1} parent=35 // pred_fallthru
          _
        // Predicated region
        $region57: #{tpu_custom_call.1} parent=35 // pred_check
          %p718 = pneg %p220
        $region58: #{tpu_custom_call.1} parent=35 // pred_check_branch
          %720 = sbr.rel (%p718) target = $region60
        $region59: #{tpu_custom_call.1} parent=35 // pred_region
          %s722 = ssub.s32 128, 128
          %723 = vsyncadd %s682, %s722
          %s724 = smul.addr %s40, 128
          %s725 = scalar_lea.hbm %s5, %s724
          %s727 = sshll.u32 %s685, 4
          %s728 = int_to_ptr.vmem [resolvable:$true] %s727
          %730 = dma.vmem_to_hbm [thread:$0]  %s728, 128, %s725, %s682
        $region60: #{tpu_custom_call.1} parent=35 // pred_fallthru
          _
        // Predicated region
        $region61: #{tpu_custom_call.1} parent=35 // pred_check
          %p731 = pneg %p246
        $region62: #{tpu_custom_call.1} parent=35 // pred_check_branch
          %733 = sbr.rel (%p731) target = $region64
        $region63: #{tpu_custom_call.1} parent=35 // pred_region
          %s735 = ssub.s32 128, 128
          %736 = vsyncadd %s687, %s735
          %s737 = smul.addr %s40, 128
          %s738 = scalar_lea.hbm %s6, %s737
          %s740 = sshll.u32 %s690, 4
          %s741 = int_to_ptr.vmem [resolvable:$true] %s740
          %743 = dma.vmem_to_hbm [thread:$0]  %s741, 128, %s738, %s687
        $region64: #{tpu_custom_call.1} parent=35 // pred_fallthru
          _
        // Predicated region
        $region65: #{tpu_custom_call.1} parent=35 // pred_check
          %p744 = pneg %p272
        $region66: #{tpu_custom_call.1} parent=35 // pred_check_branch
          %746 = sbr.rel (%p744) target = $region68
        $region67: #{tpu_custom_call.1} parent=35 // pred_region
          %s748 = ssub.s32 128, 128
          %749 = vsyncadd %s692, %s748
          %s750 = smul.addr %s40, 128
          %s751 = scalar_lea.hbm %s7, %s750
          %s753 = sshll.u32 %s695, 4
          %s754 = int_to_ptr.vmem [resolvable:$true] %s753
          %756 = dma.vmem_to_hbm [thread:$0]  %s754, 128, %s751, %s692
        $region68: #{tpu_custom_call.1} parent=35 // pred_fallthru
          _
        // Predicated region
        $region69: #{tpu_custom_call.1} parent=35 // pred_check
          %p757 = pneg %p298
        $region70: #{tpu_custom_call.1} parent=35 // pred_check_branch
          %759 = sbr.rel (%p757) target = $region72
        $region71: #{tpu_custom_call.1} parent=35 // pred_region
          %s761 = ssub.s32 128, 128
          %762 = vsyncadd %s697, %s761
          %s763 = smul.addr %s40, 128
          %s764 = scalar_lea.hbm %s8, %s763
          %s766 = sshll.u32 %s700, 4
          %s767 = int_to_ptr.vmem [resolvable:$true] %s766
          %769 = dma.vmem_to_hbm [thread:$0]  %s767, 128, %s764, %s697
        $region72: #{tpu_custom_call.1} parent=35 // pred_fallthru
          _
        // Predicated region
        $region73: #{tpu_custom_call.1} parent=35 // pred_check
          %p770 = pneg %p324
        $region74: #{tpu_custom_call.1} parent=35 // pred_check_branch
          %772 = sbr.rel (%p770) target = $region76
        $region75: #{tpu_custom_call.1} parent=35 // pred_region
          _
        $region76: #{tpu_custom_call.1} parent=35 // pred_fallthru
          _
      $region36: #{tpu_custom_call.1} parent=5 // pred_fallthru
        _
      %p773 = scmp.le.s32.totalorder 2, %s31
      // Predicated region
      $region77: #{tpu_custom_call.1} parent=5 // pred_check
        %p774 = pneg %p773
      $region78: #{tpu_custom_call.1} parent=5 // pred_check_branch
        %776 = sbr.rel (%p774) target = $region80
      $region79: #{tpu_custom_call.1} parent=5 // pred_region
        %s777 = ssub.s32 %s31, 2
        // Predicated region
        $region81: #{tpu_custom_call.1} parent=79 // pred_check
          %p778 = pneg %p200
        $region82: #{tpu_custom_call.1} parent=79 // pred_check_branch
          %780 = sbr.rel (%p778) target = $region84
        $region83: #{tpu_custom_call.1} parent=79 // pred_region
          %s781 = sand.u32 %s185, 1
          %s782 = scalar_lea.sflag [#allocation4], %s781
          %s783 = sand.u32 %s185, 1
          %s784 = smul.addr %s783, 8
          %s785 = scalar_lea.vmem [#allocation8], %s784
          %786 = dma.done %s782, 128
        $region84: #{tpu_custom_call.1} parent=79 // pred_fallthru
          _
        // Predicated region
        $region85: #{tpu_custom_call.1} parent=79 // pred_check
          %p787 = pneg %p226
        $region86: #{tpu_custom_call.1} parent=79 // pred_check_branch
          %789 = sbr.rel (%p787) target = $region88
        $region87: #{tpu_custom_call.1} parent=79 // pred_region
          %s790 = sand.u32 %s37, 1
          %s791 = scalar_lea.sflag [#allocation10], %s790
          %s792 = sand.u32 %s211, 1
          %s793 = smul.addr %s792, 8
          %s794 = scalar_lea.vmem [#allocation9], %s793
          %795 = dma.done %s791, 128
        $region88: #{tpu_custom_call.1} parent=79 // pred_fallthru
          _
        // Predicated region
        $region89: #{tpu_custom_call.1} parent=79 // pred_check
          %p796 = pneg %p252
        $region90: #{tpu_custom_call.1} parent=79 // pred_check_branch
          %798 = sbr.rel (%p796) target = $region92
        $region91: #{tpu_custom_call.1} parent=79 // pred_region
          %s799 = sand.u32 %s37, 1
          %s800 = scalar_lea.sflag [#allocation10], %s799
          %s801 = sand.u32 %s237, 1
          %s802 = smul.addr %s801, 8
          %s803 = scalar_lea.vmem [#allocation11], %s802
          %804 = dma.done %s800, 128
        $region92: #{tpu_custom_call.1} parent=79 // pred_fallthru
          _
        // Predicated region
        $region93: #{tpu_custom_call.1} parent=79 // pred_check
          %p805 = pneg %p278
        $region94: #{tpu_custom_call.1} parent=79 // pred_check_branch
          %807 = sbr.rel (%p805) target = $region96
        $region95: #{tpu_custom_call.1} parent=79 // pred_region
          %s808 = sand.u32 %s37, 1
          %s809 = scalar_lea.sflag [#allocation13], %s808
          %s810 = sand.u32 %s263, 1
          %s811 = smul.addr %s810, 8
          %s812 = scalar_lea.vmem [#allocation12], %s811
          %813 = dma.done %s809, 128
        $region96: #{tpu_custom_call.1} parent=79 // pred_fallthru
          _
        // Predicated region
        $region97: #{tpu_custom_call.1} parent=79 // pred_check
          %p814 = pneg %p304
        $region98: #{tpu_custom_call.1} parent=79 // pred_check_branch
          %816 = sbr.rel (%p814) target = $region100
        $region99: #{tpu_custom_call.1} parent=79 // pred_region
          %s817 = sand.u32 %s37, 1
          %s818 = scalar_lea.sflag [#allocation13], %s817
          %s819 = sand.u32 %s289, 1
          %s820 = smul.addr %s819, 8
          %s821 = scalar_lea.vmem [#allocation14], %s820
          %822 = dma.done %s818, 128
        $region100: #{tpu_custom_call.1} parent=79 // pred_fallthru
          _
        // Predicated region
        $region101: #{tpu_custom_call.1} parent=79 // pred_check
          %p823 = pneg %p330
        $region102: #{tpu_custom_call.1} parent=79 // pred_check_branch
          %825 = sbr.rel (%p823) target = $region104
        $region103: #{tpu_custom_call.1} parent=79 // pred_region
          %p826 = scmp.lt.s32.totalorder %s42, 1
          %s827 = scalar_select %p826, %s42, 1
          %s828 = smul.addr %s827, 8
          %s829 = scalar_lea.vmem %s9, %s828
        $region104: #{tpu_custom_call.1} parent=79 // pred_fallthru
          _
      $region80: #{tpu_custom_call.1} parent=5 // pred_fallthru
        _
    $region6: #{tpu_custom_call.1} parent=1 // loop_footer
      %s35 = sadd.s32 1, %s31
    $region7: #{tpu_custom_call.1} parent=1 // loop_footer_branch
      %30 = sbr.rel target = $region3
    $region8: #{tpu_custom_call.1} parent=1 // loop_exit
      _
    %830 = vsyncpa [#allocation3], 1
    %s831 = scalar_lea.sflag [#allocation3], 1
    %832 = vsyncpa %s831, 1
    %833 = vsyncpa [#allocation6], 1
    %s834 = scalar_lea.sflag [#allocation6], 1
    %835 = vsyncpa %s834, 1
    %836 = vsyncpa [#allocation4], 1
    %s837 = scalar_lea.sflag [#allocation4], 1
    %838 = vsyncpa %s837, 1
    %839 = vsyncpa [#allocation10], 1
    %s840 = scalar_lea.sflag [#allocation10], 1
    %841 = vsyncpa %s840, 1
    %842 = vsyncpa [#allocation13], 1
    %s843 = scalar_lea.sflag [#allocation13], 1
    %844 = vsyncpa %s843, 1

</llo_original>
